<compile_context>
chip_gen: v6e
topology: v6e:2x2x1
jax: 0.10.0
libtpu: 0.0.40
codegen_flags: <defaults>
</compile_context>

<pallas_src>
import functools
import math

import jax
import jax.numpy as jnp
from jax import lax
from jax.experimental import pallas as pl
from jax.experimental.pallas import tpu as pltpu


def _round_up(x, m):
    return ((x + m - 1) // m) * m


def _vmem_budget_bytes():
    """Per-generation VMEM working-set budget (already double-buffer inclusive)."""
    try:
        info = pltpu.get_tpu_info()
        cap = getattr(info, "vmem_capacity_bytes", None)
    except Exception:
        cap = None
    if cap is not None and cap >= (100 << 20):
        return 80 << 20   # v5e / v6e: 128 MiB physical VMEM -> big tiles
    return 32 << 20       # v7x (64 MiB physical) or unknown: stay conservative


def _rbf_kernel(feat_ref, w_ref, row_bias_ref, col_bias_ref, o_ref, *,
                two_over_gamma, clamp_val, post_scale):
    # feat_ref: (TB, Dp), w_ref: (TC, Dp), row_bias: (TB, 1), col_bias: (1, TC)
    cross = lax.dot_general(
        feat_ref[...], w_ref[...],
        dimension_numbers=(((1,), (1,)), ((), ())),
        preferred_element_type=jnp.float32)                       # (TB, TC) on MXU

    e = cross * two_over_gamma + row_bias_ref[...] + col_bias_ref[...]
    # metric >= 0 in exact math, so the exponent never exceeds clamp_val
    # (log(scale), or 0 when scale could not be folded); clamping removes
    # f32/bf16 cancellation noise so logits never exceed `scale`.
    e = jnp.minimum(e, clamp_val)
    out = jnp.exp(e)
    if post_scale is not None:       # scale <= 0: log(scale) not foldable
        out = out * post_scale
    o_ref[...] = out.astype(o_ref.dtype)


def rbf_logits_pallas(feat, weight, *, scale, gamma,
                      block_b=None, block_c=None,
                      matmul_dtype=None, out_dtype=jnp.float32):
    """feat: (B, D), weight: (C, D) -> logits (B, C) in out_dtype (default f32)."""
    B, D = feat.shape
    C, D2 = weight.shape
    assert D == D2, "feature dims of feat and weight must match"

    # No wrapper upcast: MXU operands keep the input dtype unless overridden.
    if matmul_dtype is None:
        matmul_dtype = jnp.bfloat16 if feat.dtype == jnp.bfloat16 else jnp.float32
    matmul_dtype = jnp.dtype(matmul_dtype)
    out_dtype = jnp.dtype(out_dtype)
    mm_isz = matmul_dtype.itemsize
    out_isz = out_dtype.itemsize

    scale_f = float(scale)
    gamma_f = float(gamma)

    # ---- padded extents ---------------------------------------------------
    D_pad = _round_up(D, 128)                 # dense K feed, aligned lanes
    C_pad128 = _round_up(max(C, 128), 128)    # lane-dense output last dim
    B_pad8 = _round_up(B, 8)

    budget = _vmem_budget_bytes()

    def tile_bytes(bb, bc):
        # double-buffered working set (what the pipeline actually holds)
        return (2 * bb * D_pad * mm_isz          # feat tiles
                + 2 * bc * D_pad * mm_isz        # weight tiles
                + 2 * max(bb, 8) * 128 * 4       # row-bias tiles (lane-padded)
                + 2 * 8 * bc * 4                 # col-bias tiles (sublane-padded)
                + 2 * bb * bc * out_isz)         # output tiles

    # ---- class tile: hold the whole weight resident whenever it fits -------
    if block_c is None:
        bc = C_pad128
    else:
        bc = min(_round_up(int(block_c), 128), C_pad128)
    while bc > 128 and tile_bytes(64, bc) > budget:
        bc = max(128, _round_up(bc // 2, 128))
    C_pad = _round_up(C_pad128, bc)
    num_c = C_pad // bc

    # ---- batch tile ---------------------------------------------------------
    target_b = int(block_b) if block_b is not None else (1024 if budget >= (64 << 20) else 512)
    bb = min(_round_up(target_b, 8), B_pad8)
    while bb > 8 and tile_bytes(bb, bc) > budget:
        bb = max(8, _round_up(bb // 2, 8))

    if bb >= B_pad8:
        bb = B                       # single full-extent batch tile, no feat pad
        B_pad = B
    else:
        # Prefer a multiple-of-8 divisor of round_up(B, 8): avoids a jnp.pad
        # copy of feat beyond at most 7 rows.
        m = B_pad8 // 8
        d = bb // 8
        while d > 1 and m % d != 0:
            d -= 1
        if 8 * d * 4 < bb:           # no decent divisor: fall back to padding
            B_pad = _round_up(B_pad8, bb)
        else:
            bb = 8 * d
            B_pad = B_pad8
    num_b = B_pad // bb

    # ---- make sure both TensorCores get work (v7x megacore) ----------------
    if num_b * num_c == 1 and B >= 16:
        bb = _round_up((B + 1) // 2, 8)
        B_pad = 2 * bb
        num_b = 2

    # ---- pad / cast inputs; hoist norms and fold constants ------------------
    feat_mm = feat if feat.dtype == matmul_dtype else feat.astype(matmul_dtype)
    w_mm = weight if weight.dtype == matmul_dtype else weight.astype(matmul_dtype)
    if D_pad != D:
        feat_mm = jnp.pad(feat_mm, ((0, 0), (0, D_pad - D)))
        w_mm = jnp.pad(w_mm, ((0, 0), (0, D_pad - D)))
    if B_pad != B:
        feat_mm = jnp.pad(feat_mm, ((0, B_pad - B), (0, 0)))
    if C_pad != C:
        w_mm = jnp.pad(w_mm, ((0, C_pad - C), (0, 0)))

    f32 = jnp.float32
    neg_inv_gamma = -1.0 / gamma_f
    row_bias = neg_inv_gamma * jnp.sum(jnp.square(feat.astype(f32)),
                                       axis=-1, keepdims=True)            # (B, 1)
    col_bias = neg_inv_gamma * jnp.sum(jnp.square(weight.astype(f32)),
                                       axis=-1)[None, :]                  # (1, C)
    if scale_f > 0.0:
        log_scale = math.log(scale_f)
        col_bias = col_bias + log_scale          # fold scale into the exponent
        clamp_val, post_scale = log_scale, None
    else:
        clamp_val, post_scale = 0.0, scale_f
    if B_pad != B:
        row_bias = jnp.pad(row_bias, ((0, B_pad - B), (0, 0)))
    if C_pad != C:
        col_bias = jnp.pad(col_bias, ((0, 0), (0, C_pad - C)))

    kernel = functools.partial(
        _rbf_kernel,
        two_over_gamma=2.0 / gamma_f,
        clamp_val=clamp_val,
        post_scale=post_scale)

    # Larger-block axis goes OUTERMOST: the tile indexed only by the outer
    # axis keeps its block index across the inner loop and is not re-DMA'd;
    # the smaller tile is the one re-streamed every inner step.
    class_outer = bc > bb
    if class_outer:
        grid = (num_c, num_b)
        f_idx = lambda c, b: (b, 0)
        w_idx = lambda c, b: (c, 0)
        rb_idx = lambda c, b: (b, 0)
        cb_idx = lambda c, b: (0, c)
        o_idx = lambda c, b: (b, c)
    else:
        grid = (num_b, num_c)
        f_idx = lambda b, c: (b, 0)
        w_idx = lambda b, c: (c, 0)
        rb_idx = lambda b, c: (b, 0)
        cb_idx = lambda b, c: (0, c)
        o_idx = lambda b, c: (b, c)

    # tile_bytes already includes double buffering: limit = tiles + headroom.
    vmem_limit = int(min(max(tile_bytes(bb, bc) + (8 << 20), 32 << 20), 100 << 20))

    out = pl.pallas_call(
        kernel,
        out_shape=jax.ShapeDtypeStruct((B_pad, C_pad), out_dtype),
        grid_spec=pltpu.PrefetchScalarGridSpec(
            num_scalar_prefetch=0,
            grid=grid,
            in_specs=[
                pl.BlockSpec((bb, D_pad), f_idx),   # feat tile (mm dtype)
                pl.BlockSpec((bc, D_pad), w_idx),   # weight tile (mm dtype)
                pl.BlockSpec((bb, 1), rb_idx),      # -||f||^2/gamma
                pl.BlockSpec((1, bc), cb_idx),      # -||w||^2/gamma + log(scale)
            ],
            out_specs=pl.BlockSpec((bb, bc), o_idx),
        ),
        compiler_params=pltpu.CompilerParams(
            dimension_semantics=("parallel", "parallel"),
            vmem_limit_bytes=vmem_limit),
    )(feat_mm, w_mm, row_bias, col_bias)

    return out[:B, :C]


def rbf_logits_ref(feat, weight, *, scale, gamma):
    # Pure-JAX reference mirroring the PyTorch broadcast formulation exactly.
    diff = weight[None, :, :].astype(jnp.float32) - feat[:, None, :].astype(jnp.float32)
    metric = jnp.sum(diff * diff, axis=-1)
    return scale * jnp.exp(-metric / gamma)


def rbf_logits(feat, weight, *, scale, gamma, min_pallas_elems=1 << 18, **kw):
    """Dispatcher: for genuinely tiny problems a single fused XLA expression
    beats the fixed pallas_call overhead + padded lane traffic.  NOTE: the two
    paths use mathematically equivalent but numerically different
    formulations (diff^2 vs expansion), so results may differ at the f32
    rounding level across the threshold."""
    B, D = feat.shape
    C = weight.shape[0]
    if B * C * D < min_pallas_elems:
        return rbf_logits_ref(feat, weight, scale=scale, gamma=gamma)
    return rbf_logits_pallas(feat, weight, scale=scale, gamma=gamma, **kw)


if __name__ == "__main__":
    # Small shapes consistent with the module: feature_dim=32, class_num=16, batch=8.
    feature_dim = 32
    class_num = 16
    batch = 8
    scale = 16.0
    gamma = 8.0

    key = jax.random.PRNGKey(0)
    k_feat, k_w, k_b = jax.random.split(key, 3)

    # Deterministic parameter init: Xavier-uniform bound for weight (as in the module).
    bound = (6.0 / (class_num + feature_dim)) ** 0.5
    weight = jax.random.uniform(
        k_w, (class_num, feature_dim), jnp.float32, minval=-bound, maxval=bound)
    # bias exists in the PyTorch module but is unused in forward() — intentionally unused.
    bias = jax.random.uniform(k_b, (class_num,), jnp.float32)

    feat = jax.random.normal(k_feat, (batch, feature_dim), jnp.float32)

    # Exercise the Pallas kernel directly (the dispatcher would route these
    # tiny shapes to plain XLA, which is the recommended production path).
    out = rbf_logits_pallas(feat, weight, scale=scale, gamma=gamma)
    out = jax.block_until_ready(out)

    ref = rbf_logits_ref(feat, weight, scale=scale, gamma=gamma)
    assert out.shape == (batch, class_num)
    assert jnp.allclose(out, ref, atol=1e-4, rtol=1e-4), "mismatch vs reference"

    print("KERNEL_OK")
</pallas_src>

<mosaic_0001>
module attributes {stable_mosaic.version = 11 : i64} {
  func.func @_rbf_kernel(%arg0: i32, %arg1: i32, %arg2: memref<8x128xf32, #tpu.memory_space<vmem>>, %arg3: memref<128x128xf32, #tpu.memory_space<vmem>>, %arg4: memref<8x1xf32, #tpu.memory_space<vmem>>, %arg5: memref<1x128xf32, #tpu.memory_space<vmem>>, %arg6: memref<8x128xf32, #tpu.memory_space<vmem>>) attributes {dimension_semantics = [#tpu.dimension_semantics<parallel>, #tpu.dimension_semantics<parallel>], iteration_bounds = array<i64: 1, 1>, scalar_prefetch = 0 : i64, scratch_operands = 0 : i64, tpu.core_type = #tpu.core_type<tc>, window_params = [{transform_indices = @transform_0, window_bounds = array<i64: 8, 128>}, {transform_indices = @transform_1, window_bounds = array<i64: 128, 128>}, {transform_indices = @transform_2, window_bounds = array<i64: 8, 1>}, {transform_indices = @transform_3, window_bounds = array<i64: 1, 128>}, {transform_indices = @transform_4, window_bounds = array<i64: 8, 128>}]} {
    %c0 = arith.constant 0 : index
    %c0_0 = arith.constant 0 : index
    %0 = vector.load %arg2[%c0, %c0_0] : memref<8x128xf32, #tpu.memory_space<vmem>>, vector<8x128xf32>
    %c0_1 = arith.constant 0 : index
    %c0_2 = arith.constant 0 : index
    %1 = vector.load %arg3[%c0_1, %c0_2] : memref<128x128xf32, #tpu.memory_space<vmem>>, vector<128x128xf32>
    %cst = arith.constant dense<0.000000e+00> : vector<8x128xf32>
    %2 = tpu.matmul %0, %1, %cst {dimension_numbers = #tpu.dot_dimension_numbers<[1], [1], [0], [0], [0, 0, 1, 0], [], []>} : vector<8x128xf32>, vector<128x128xf32>, vector<8x128xf32> -> vector<8x128xf32>
    %cst_3 = arith.constant 2.500000e-01 : f32
    %3 = vector.broadcast %cst_3 : f32 to vector<8x128xf32>
    %4 = arith.mulf %2, %3 : vector<8x128xf32>
    %c0_4 = arith.constant 0 : index
    %c0_5 = arith.constant 0 : index
    %5 = vector.load %arg4[%c0_4, %c0_5] : memref<8x1xf32, #tpu.memory_space<vmem>>, vector<8x1xf32>
    %6 = vector.broadcast %5 : vector<8x1xf32> to vector<8x128xf32>
    %7 = arith.addf %4, %6 : vector<8x128xf32>
    %c0_6 = arith.constant 0 : index
    %c0_7 = arith.constant 0 : index
    %8 = vector.load %arg5[%c0_6, %c0_7] : memref<1x128xf32, #tpu.memory_space<vmem>>, vector<1x128xf32>
    %9 = vector.broadcast %8 : vector<1x128xf32> to vector<8x128xf32>
    %10 = arith.addf %7, %9 : vector<8x128xf32>
    %cst_8 = arith.constant 2.77258873 : f32
    %11 = vector.broadcast %cst_8 : f32 to vector<8x128xf32>
    %12 = arith.minimumf %10, %11 : vector<8x128xf32>
    %13 = math.exp %12 : vector<8x128xf32>
    %c0_9 = arith.constant 0 : index
    %c0_10 = arith.constant 0 : index
    %14 = vector.load %arg6[%c0_9, %c0_10] : memref<8x128xf32, #tpu.memory_space<vmem>>, vector<8x128xf32>
    tpu.vector_store %arg6[%c0_9, %c0_10], %13 {strides = array<i32>} : memref<8x128xf32, #tpu.memory_space<vmem>>, vector<8x128xf32>,
    return
  }
  func.func @transform_0(%arg0: i32, %arg1: i32) -> (i32, i32) {
    %c0_i32 = arith.constant 0 : i32
    %c0_i32_0 = arith.constant 0 : i32
    return %arg1, %c0_i32 : i32, i32
  }
  func.func @transform_1(%arg0: i32, %arg1: i32) -> (i32, i32) {
    %c0_i32 = arith.constant 0 : i32
    %c0_i32_0 = arith.constant 0 : i32
    return %arg0, %c0_i32 : i32, i32
  }
  func.func @transform_2(%arg0: i32, %arg1: i32) -> (i32, i32) {
    %c0_i32 = arith.constant 0 : i32
    %c0_i32_0 = arith.constant 0 : i32
    return %arg1, %c0_i32 : i32, i32
  }
  func.func @transform_3(%arg0: i32, %arg1: i32) -> (i32, i32) {
    %c0_i32 = arith.constant 0 : i32
    %c0_i32_0 = arith.constant 0 : i32
    return %c0_i32, %arg0 : i32, i32
  }
  func.func @transform_4(%arg0: i32, %arg1: i32) -> (i32, i32) {
    %c0_i32 = arith.constant 0 : i32
    return %arg1, %arg0 : i32, i32
  }
}

</mosaic_0001>

<llo_original>
// kernel: tpu_custom_call.1
$region0: #{tpu_custom_call.1}
  #allocation0 [shape = 'u32[]', space=smem, size = 0x4, offset = 0x4, fixed_abs, tag = 'smem constant byte address 0x4 - core index']
  #allocation1 [shape = 'u32[144,128]{1,0:T(1,128)}', space=vmem, size = 0x12000, scoped, tag = 'internal scratch']
  %s0 = inlined_call_operand.vmem [shape: f32[8,128], index: 0, kind: input, shape index: {}]
  %s1 = inlined_call_operand.hbm [shape: f32[128,128], index: 1, kind: input, shape index: {}]
  %s2 = inlined_call_operand.vmem [shape: f32[8,1], index: 2, kind: input, shape index: {}]
  %s3 = inlined_call_operand.vmem [shape: f32[1,128], index: 3, kind: input, shape index: {}]
  %s4 = inlined_call_operand.hbm [shape: f32[8,128], index: 4, kind: output, shape index: {}]
  %s5 = sld [smem:[#allocation0]]
  $region30: #{tpu_custom_call.1} parent=0
    _
  %s7 = ssub.s32 1, %s5
  %s8 = scalar_select 0, %s7, %s5
  $region1: #{tpu_custom_call.1} parent=0
    #allocation2 [shape = 'u8[65536]{0}', space=vmem, size = 0x10000, scoped, tag = 'input window, operand 1, single buffered']
    #allocation3 [shape = 's32[1]{0}', space=sflag, size = 0x4, scoped, tag = 'scoped memory for tpu_custom_call.1']
    #allocation4 [shape = 's32[1]{0}', space=sflag, size = 0x4, scoped, tag = 'scoped memory for tpu_custom_call.1']
    #allocation5 [shape = 'u8[4096]{0}', space=vmem, size = 0x1000, scoped, tag = 'output window, operand 0, single buffered']
    %9 = vsyncpa [#allocation3], 0
    %10 = vsyncpa [#allocation4], 0
    // Predicated region
    $region2: #{tpu_custom_call.1} parent=1 // pred_check
      _
    $region3: #{tpu_custom_call.1} parent=1 // pred_check_branch
      %12 = sbr.rel (0) target = $region5
    $region4: #{tpu_custom_call.1} parent=1 // pred_region
      _
    $region5: #{tpu_custom_call.1} parent=1 // pred_fallthru
      _
    // Predicated region
    $region6: #{tpu_custom_call.1} parent=1 // pred_check
      _
    $region7: #{tpu_custom_call.1} parent=1 // pred_check_branch
      %14 = sbr.rel (0) target = $region9
    $region8: #{tpu_custom_call.1} parent=1 // pred_region
      %s16 = ssub.s32 2048, 2048
      %17 = vsyncadd [#allocation3], %s16
      %s18 = sshll.u32 [#allocation2], 4
      %s19 = int_to_ptr.vmem [resolvable:$true] %s18
      %24 = dma.hbm_to_vmem [thread:$0]  %s1, 2048, %s19, [#allocation3], 128, 128, 8
    $region9: #{tpu_custom_call.1} parent=1 // pred_fallthru
      _
    // Predicated region
    $region10: #{tpu_custom_call.1} parent=1 // pred_check
      _
    $region11: #{tpu_custom_call.1} parent=1 // pred_check_branch
      %26 = sbr.rel (0) target = $region13
    $region12: #{tpu_custom_call.1} parent=1 // pred_region
      _
    $region13: #{tpu_custom_call.1} parent=1 // pred_fallthru
      _
    // Predicated region
    $region14: #{tpu_custom_call.1} parent=1 // pred_check
      _
    $region15: #{tpu_custom_call.1} parent=1 // pred_check_branch
      %28 = sbr.rel (0) target = $region17
    $region16: #{tpu_custom_call.1} parent=1 // pred_region
      _
    $region17: #{tpu_custom_call.1} parent=1 // pred_fallthru
      _
    // Predicated region
    $region18: #{tpu_custom_call.1} parent=1 // pred_check
      _
    $region19: #{tpu_custom_call.1} parent=1 // pred_check_branch
      %30 = sbr.rel (0) target = $region21
    $region20: #{tpu_custom_call.1} parent=1 // pred_region
      %31 = dma.done [#allocation3], 2048
    $region21: #{tpu_custom_call.1} parent=1 // pred_fallthru
      _
    %v32 = vld [vmem:[%s0] sm:$0xff]
    %v33 = vld [vmem:[#allocation2] sm:$0xff]
    %v34 = vld [vmem:[#allocation2 + $0x8] sm:$0xff]
    %v35 = vld [vmem:[#allocation2 + $0x10] sm:$0xff]
    %v36 = vld [vmem:[#allocation2 + $0x18] sm:$0xff]
    %v37 = vld [vmem:[#allocation2 + $0x20] sm:$0xff]
    %v38 = vld [vmem:[#allocation2 + $0x28] sm:$0xff]
    %v39 = vld [vmem:[#allocation2 + $0x30] sm:$0xff]
    %v40 = vld [vmem:[#allocation2 + $0x38] sm:$0xff]
    %v41 = vld [vmem:[#allocation2 + $0x40] sm:$0xff]
    %v42 = vld [vmem:[#allocation2 + $0x48] sm:$0xff]
    %v43 = vld [vmem:[#allocation2 + $0x50] sm:$0xff]
    %v44 = vld [vmem:[#allocation2 + $0x58] sm:$0xff]
    %v45 = vld [vmem:[#allocation2 + $0x60] sm:$0xff]
    %v46 = vld [vmem:[#allocation2 + $0x68] sm:$0xff]
    %v47 = vld [vmem:[#allocation2 + $0x70] sm:$0xff]
    %v48 = vld [vmem:[#allocation2 + $0x78] sm:$0xff]
    %49 = vmatprep.subr.mxu0 0.0
    %50 = vmatpush1.xpose.msra.mxu0 %v48
    %51 = vmatprep.subr.mxu0 0.0
    %52 = vmatpush1.xpose.msra.mxu0 %v47
    %53 = vmatprep.subr.mxu0 0.0
    %54 = vmatpush1.xpose.msra.mxu0 %v46
    %55 = vmatprep.subr.mxu0 0.0
    %56 = vmatpush1.xpose.msra.mxu0 %v45
    %57 = vmatprep.subr.mxu0 0.0
    %58 = vmatpush1.xpose.msra.mxu0 %v44
    %59 = vmatprep.subr.mxu0 0.0
    %60 = vmatpush1.xpose.msra.mxu0 %v43
    %61 = vmatprep.subr.mxu0 0.0
    %62 = vmatpush1.xpose.msra.mxu0 %v42
    %63 = vmatprep.subr.mxu0 0.0
    %64 = vmatpush1.xpose.msra.mxu0 %v41
    %65 = vmatprep.subr.mxu0 0.0
    %66 = vmatpush1.xpose.msra.mxu0 %v40
    %67 = vmatprep.subr.mxu0 0.0
    %68 = vmatpush1.xpose.msra.mxu0 %v39
    %69 = vmatprep.subr.mxu0 0.0
    %70 = vmatpush1.xpose.msra.mxu0 %v38
    %71 = vmatprep.subr.mxu0 0.0
    %72 = vmatpush1.xpose.msra.mxu0 %v37
    %73 = vmatprep.subr.mxu0 0.0
    %74 = vmatpush1.xpose.msra.mxu0 %v36
    %75 = vmatprep.subr.mxu0 0.0
    %76 = vmatpush1.xpose.msra.mxu0 %v35
    %77 = vmatprep.subr.mxu0 0.0
    %78 = vmatpush1.xpose.msra.mxu0 %v34
    %79 = vmatprep.subr.mxu0 0.0
    %80 = vmatpush1.xpose.msra.mxu0 %v33
    %81 = vmatprep.subr.mxu0 0.0
    %82 = vmatpush2.xpose.msra.mxu0 0.0
    %83 = vmatprep.subr.mxu0 0.0
    %84 = vmatpush2.xpose.msra.mxu0 0.0
    %85 = vmatprep.subr.mxu0 0.0
    %86 = vmatpush2.xpose.msra.mxu0 0.0
    %87 = vmatprep.subr.mxu0 0.0
    %88 = vmatpush2.xpose.msra.mxu0 0.0
    %89 = vmatprep.subr.mxu0 0.0
    %90 = vmatpush2.xpose.msra.mxu0 0.0
    %91 = vmatprep.subr.mxu0 0.0
    %92 = vmatpush2.xpose.msra.mxu0 0.0
    %93 = vmatprep.subr.mxu0 0.0
    %94 = vmatpush2.xpose.msra.mxu0 0.0
    %95 = vmatprep.subr.mxu0 0.0
    %96 = vmatpush2.xpose.msra.mxu0 0.0
    %97 = vmatprep.subr.mxu0 0.0
    %98 = vmatpush2.xpose.msra.mxu0 0.0
    %99 = vmatprep.subr.mxu0 0.0
    %100 = vmatpush2.xpose.msra.mxu0 0.0
    %101 = vmatprep.subr.mxu0 0.0
    %102 = vmatpush2.xpose.msra.mxu0 0.0
    %103 = vmatprep.subr.mxu0 0.0
    %104 = vmatpush2.xpose.msra.mxu0 0.0
    %105 = vmatprep.subr.mxu0 0.0
    %106 = vmatpush2.xpose.msra.mxu0 0.0
    %107 = vmatprep.subr.mxu0 0.0
    %108 = vmatpush2.xpose.msra.mxu0 0.0
    %109 = vmatprep.subr.mxu0 0.0
    %110 = vmatpush2.xpose.msra.mxu0 0.0
    %111 = vmatprep.subr.mxu0 0.0
    %112 = vmatpush2.xpose.msra.mxu0 0.0
    %113 = vmatprep.mubr.f32.mxu0 0.0
    %114 = vmatmul.mubr.f32.gmra.mxu0 %v32
    %v115 = vpop.f32.mrf.mxu0
    %v116 = vadd.f32 0.0, %v115
    %v117 = vpop.f32.mrf.mxu0
    %118 = vdwg.mxu0
    %v119 = vmul.f32 %v116, 0.25
    %v120 = vld [vmem:[%s2] sm:$0xff]
    %122 = vset.pattern.permute.xlu0 0
    %123 = vperm.xlu0 %122, %v120
    %v124 = vpop.permute.xlu0 %123
    %v126 = vadd.f32 %v119, %v124
    %v127 = vld [vmem:[%s3] sm:$0x1]
    %v129 = vlaneseq
    %v130 = vshrl.u32 %v129, 7
    %v131 = vsub.s32 0, %v130
    %v132 = vrot.slane %v127, %v131
    %v134 = vadd.f32 %v126, %v132
    %v135 = vmin.f32 %v134, 2.7725887
    %v136 = vmul.f32 %v135, 1.442695
    %v137 = vpow.pop %v136
    %138 = vst [vmem:[#allocation5] sm:$0xff] %v137
    // Predicated region
    $region22: #{tpu_custom_call.1} parent=1 // pred_check
      _
    $region23: #{tpu_custom_call.1} parent=1 // pred_check_branch
      %140 = sbr.rel (0) target = $region25
    $region24: #{tpu_custom_call.1} parent=1 // pred_region
      %s142 = ssub.s32 128, 128
      %143 = vsyncadd [#allocation4], %s142
      %s145 = sshll.u32 [#allocation5], 4
      %s146 = int_to_ptr.vmem [resolvable:$true] %s145
      %148 = dma.vmem_to_hbm [thread:$0]  %s146, 128, %s4, [#allocation4]
    $region25: #{tpu_custom_call.1} parent=1 // pred_fallthru
      _
    // Predicated region
    $region26: #{tpu_custom_call.1} parent=1 // pred_check
      _
    $region27: #{tpu_custom_call.1} parent=1 // pred_check_branch
      %150 = sbr.rel (0) target = $region29
    $region28: #{tpu_custom_call.1} parent=1 // pred_region
      %151 = dma.done [#allocation4], 128
    $region29: #{tpu_custom_call.1} parent=1 // pred_fallthru
      _
    %152 = vsyncpa [#allocation3], 1
    %153 = vsyncpa [#allocation4], 1

</llo_original>
